<compile_context>
chip_gen: v7x
topology: tpu7x:2x2x1
jax: 0.10.0
libtpu: 0.0.40
codegen_flags: <defaults>
</compile_context>

<pallas_src>
import functools

import jax
import jax.numpy as jnp
from jax import lax
from jax.experimental import pallas as pl
from jax.experimental.pallas import tpu as pltpu


def _accuracy_kernel(y_ref, t_ref, out_ref, *, ignored_class):
    # y_ref: (TILE_N, C) logits (native dtype) in VMEM
    # t_ref: (TILE_N, 1) int32 targets in VMEM
    # out_ref: (1, 2) int32 in SMEM -> per-tile [num_correct, num_valid]
    y = y_ref[...]
    t = t_ref[...]
    n, c = y.shape

    # argmax along the class (lane) axis, first-occurrence tie-break.
    col = lax.broadcasted_iota(jnp.int32, (n, c), 1)
    max_val = jnp.max(y, axis=-1, keepdims=True)
    idx = jnp.min(jnp.where(y == max_val, col, jnp.int32(c)),
                  axis=-1, keepdims=True)          # (TILE_N, 1) i32
    # TODO(synk): rows that are all-NaN yield idx == C (sentinel), which
    # differs from torch.argmax's NaN propagation.

    ign = jnp.int32(ignored_class)
    mask = (t != ign) & (idx != ign)               # (TILE_N, 1) bool
    correct = (idx == t) & mask                    # (TILE_N, 1) bool

    out_ref[0, 0] = jnp.sum(correct.astype(jnp.int32))
    out_ref[0, 1] = jnp.sum(mask.astype(jnp.int32))


def accuracy(y, t, ignored_class: int = -1, tile_n: int | None = None):
    """Pallas-backed micro accuracy. y: (N, C) float logits, t: (N,) int."""
    n, c = y.shape

    if tile_n is None:
        # Aim for ~2 MiB logits per tile (double-buffered => ~4 MiB), which
        # stays under v5e's 16 MiB scoped default and v7x's smaller VMEM,
        # while being large enough (>= few MiB for big C) to amortize the
        # ~0.35 us per-grid-step overhead.
        itemsize = jnp.dtype(y.dtype).itemsize
        target_bytes = 2 * 1024 * 1024
        tile_n = max(8, min(512, (target_bytes // max(1, c * itemsize)) // 8 * 8))
        # Don't pad tiny inputs up to a huge tile.
        tile_n = min(tile_n, ((n + 7) // 8) * 8)
        tile_n = max(8, tile_n)

    n_pad = ((n + tile_n - 1) // tile_n) * tile_n
    if n_pad != n:
        # Padded rows get t = ignored_class => masked out, never counted.
        y = jnp.pad(y, ((0, n_pad - n), (0, 0)))
        t = jnp.pad(t, (0, n_pad - n), constant_values=ignored_class)

    t2d = t.astype(jnp.int32).reshape(n_pad, 1)
    grid_n = n_pad // tile_n

    kernel = functools.partial(_accuracy_kernel, ignored_class=ignored_class)
    counts = pl.pallas_call(
        kernel,
        out_shape=jax.ShapeDtypeStruct((grid_n, 2), jnp.int32),
        grid=(grid_n,),
        in_specs=[
            pl.BlockSpec((tile_n, c), lambda i: (i, 0)),
            pl.BlockSpec((tile_n, 1), lambda i: (i, 0)),
        ],
        out_specs=pl.BlockSpec((1, 2), lambda i: (i, 0),
                               memory_space=pltpu.MemorySpace.SMEM),
        compiler_params=pltpu.CompilerParams(
            dimension_semantics=("parallel",)),
    )(y, t2d)

    totals = jnp.sum(counts, axis=0)
    num_correct = totals[0].astype(jnp.float32)
    num_valid = totals[1].astype(jnp.float32)
    # Final scalar division is trivial glue (PyTorch does .item() / shape[0]).
    return num_correct / num_valid


def _reference(y, t, ignored_class=-1):
    idx = jnp.argmax(y, axis=1)
    m = (t != ignored_class) & (idx != ignored_class)
    return (jnp.sum((idx == t) & m) / jnp.sum(m)).astype(jnp.float32)


if __name__ == "__main__":
    key = jax.random.PRNGKey(0)
    k_y, k_t, k_m, k_y2, k_t2 = jax.random.split(key, 5)

    # Test 1: small f32 problem (single tile).
    N, C = 16, 8
    y = jax.random.normal(k_y, (N, C), dtype=jnp.float32)
    t = jax.random.randint(k_t, (N,), 0, C, dtype=jnp.int32)
    ignore_mask = jax.random.bernoulli(k_m, 0.25, (N,))
    t = jnp.where(ignore_mask, jnp.int32(-1), t)

    acc = jax.block_until_ready(accuracy(y, t, ignored_class=-1))
    ref = _reference(y, t, -1)
    assert jnp.allclose(acc, ref), (acc, ref)

    # Test 2: multi-tile grid with row padding (N=40, tile_n=8 -> 5 tiles),
    # bf16 logits consumed natively in the kernel.
    N2, C2 = 40, 8
    y2 = jax.random.normal(k_y2, (N2, C2), dtype=jnp.float32).astype(jnp.bfloat16)
    t2 = jax.random.randint(k_t2, (N2,), 0, C2, dtype=jnp.int32)

    acc2 = jax.block_until_ready(accuracy(y2, t2, ignored_class=-1, tile_n=8))
    ref2 = _reference(y2, t2, -1)
    assert jnp.allclose(acc2, ref2), (acc2, ref2)

    print("KERNEL_OK")
</pallas_src>

<mosaic_0001>
module attributes {stable_mosaic.version = 11 : i64} {
  func.func @_accuracy_kernel(%arg0: i32, %arg1: memref<16x8xf32, #tpu.memory_space<vmem>>, %arg2: memref<16x1xi32, #tpu.memory_space<vmem>>, %arg3: memref<1x2xi32, #tpu.memory_space<smem>>) attributes {dimension_semantics = [#tpu.dimension_semantics<parallel>], iteration_bounds = array<i64: 1>, scalar_prefetch = 0 : i64, scratch_operands = 0 : i64, tpu.core_type = #tpu.core_type<tc>, window_params = [{transform_indices = @transform_0, window_bounds = array<i64: 16, 8>}, {transform_indices = @transform_1, window_bounds = array<i64: 16, 1>}, {transform_indices = @transform_2, window_bounds = array<i64: 1, 2>}]} {
    %c0 = arith.constant 0 : index
    %c0_0 = arith.constant 0 : index
    %0 = vector.load %arg1[%c0, %c0_0] : memref<16x8xf32, #tpu.memory_space<vmem>>, vector<16x8xf32>
    %c0_1 = arith.constant 0 : index
    %c0_2 = arith.constant 0 : index
    %1 = vector.load %arg2[%c0_1, %c0_2] : memref<16x1xi32, #tpu.memory_space<vmem>>, vector<16x1xi32>
    %2 = tpu.iota {dimensions = array<i32: 1>} : vector<16x8xi32>
    %cst = arith.constant dense<0xFF800000> : vector<16xf32>
    %3 = vector.multi_reduction <maximumf>, %0, %cst [1] : vector<16x8xf32> to vector<16xf32>
    %4 = vector.shape_cast %3 : vector<16xf32> to vector<16x1xf32>
    %5 = vector.broadcast %4 : vector<16x1xf32> to vector<16x8xf32>
    %6 = arith.cmpf oeq, %0, %5 : vector<16x8xf32>
    %c8_i32 = arith.constant 8 : i32
    %7 = vector.broadcast %c8_i32 : i32 to vector<16x8xi32>
    %8 = arith.select %6, %2, %7 : vector<16x8xi1>, vector<16x8xi32>
    %cst_3 = arith.constant dense<2147483647> : vector<16xi32>
    %9 = vector.multi_reduction <minsi>, %8, %cst_3 [1] : vector<16x8xi32> to vector<16xi32>
    %10 = vector.shape_cast %9 : vector<16xi32> to vector<16x1xi32>
    %c-1_i32 = arith.constant -1 : i32
    %11 = vector.broadcast %c-1_i32 : i32 to vector<16x1xi32>
    %12 = arith.cmpi ne, %1, %11 : vector<16x1xi32>
    %c-1_i32_4 = arith.constant -1 : i32
    %13 = vector.broadcast %c-1_i32_4 : i32 to vector<16x1xi32>
    %14 = arith.cmpi ne, %10, %13 : vector<16x1xi32>
    %15 = arith.andi %12, %14 : vector<16x1xi1>
    %16 = arith.cmpi eq, %10, %1 : vector<16x1xi32>
    %17 = arith.andi %16, %15 : vector<16x1xi1>
    %18 = arith.extui %17 : vector<16x1xi1> to vector<16x1xi32>
    %19 = vector.shape_cast %18 : vector<16x1xi32> to vector<1x16x1xi32>
    %cst_5 = arith.constant dense<0> : vector<1xi32>
    %20 = vector.multi_reduction <add>, %19, %cst_5 [1, 2] : vector<1x16x1xi32> to vector<1xi32>
    %21 = vector.shape_cast %20 : vector<1xi32> to vector<1x1x1xi32>
    %22 = vector.extract %21[0, 0, 0] : i32 from vector<1x1x1xi32>
    %c0_6 = arith.constant 0 : index
    %c0_7 = arith.constant 0 : index
    %23 = memref.load %arg3[%c0_6, %c0_7] : memref<1x2xi32, #tpu.memory_space<smem>>
    memref.store %22, %arg3[%c0_6, %c0_7] : memref<1x2xi32, #tpu.memory_space<smem>>
    %24 = arith.extui %15 : vector<16x1xi1> to vector<16x1xi32>
    %25 = vector.shape_cast %24 : vector<16x1xi32> to vector<1x16x1xi32>
    %cst_8 = arith.constant dense<0> : vector<1xi32>
    %26 = vector.multi_reduction <add>, %25, %cst_8 [1, 2] : vector<1x16x1xi32> to vector<1xi32>
    %27 = vector.shape_cast %26 : vector<1xi32> to vector<1x1x1xi32>
    %28 = vector.extract %27[0, 0, 0] : i32 from vector<1x1x1xi32>
    %c0_9 = arith.constant 0 : index
    %c1 = arith.constant 1 : index
    %29 = memref.load %arg3[%c0_9, %c1] : memref<1x2xi32, #tpu.memory_space<smem>>
    memref.store %28, %arg3[%c0_9, %c1] : memref<1x2xi32, #tpu.memory_space<smem>>
    return
  }
  func.func @transform_0(%arg0: i32) -> (i32, i32) {
    %c0_i32 = arith.constant 0 : i32
    %c0_i32_0 = arith.constant 0 : i32
    return %arg0, %c0_i32 : i32, i32
  }
  func.func @transform_1(%arg0: i32) -> (i32, i32) {
    %c0_i32 = arith.constant 0 : i32
    %c0_i32_0 = arith.constant 0 : i32
    return %arg0, %c0_i32 : i32, i32
  }
  func.func @transform_2(%arg0: i32) -> (i32, i32) {
    %c0_i32 = arith.constant 0 : i32
    %c0_i32_0 = arith.constant 0 : i32
    return %arg0, %c0_i32 : i32, i32
  }
}

</mosaic_0001>

<llo_original>
// kernel: tpu_custom_call.1
$region0: #{tpu_custom_call.1}
  #allocation0 [shape = 'u32[]', space=smem, size = 0x4, offset = 0x4, fixed_abs, tag = 'smem constant byte address 0x4 - core index']
  #allocation1 [shape = 'u32[144,128]{1,0:T(1,128)}', space=vmem, size = 0x12000, scoped, tag = 'internal scratch']
  %s0 = inlined_call_operand.vmem [shape: f32[16,8], index: 0, kind: input, shape index: {}]
  %s1 = inlined_call_operand.vmem [shape: s32[16,1], index: 1, kind: input, shape index: {}]
  %s2 = inlined_call_operand.hbm [shape: s32[1,2], index: 2, kind: output, shape index: {}]
  %s3 = sld [smem:[#allocation0]]
  $region18: #{tpu_custom_call.1} parent=0
    _
  %s5 = ssub.s32 1, %s3
  %s6 = scalar_select 0, %s5, %s3
  $region1: #{tpu_custom_call.1} parent=0
    #allocation2 [shape = 'u8[512]{0}', space=smem, size = 0x200, scoped, tag = 'output window, operand 0, single buffered']
    #allocation3 [shape = 's32[1]{0}', space=sflag, size = 0x4, scoped, tag = 'scoped memory for tpu_custom_call.1']
    %7 = vsyncpa [#allocation3], 0
    // Predicated region
    $region2: #{tpu_custom_call.1} parent=1 // pred_check
      _
    $region3: #{tpu_custom_call.1} parent=1 // pred_check_branch
      %9 = sbr.rel (0) target = $region5
    $region4: #{tpu_custom_call.1} parent=1 // pred_region
      _
    $region5: #{tpu_custom_call.1} parent=1 // pred_fallthru
      _
    // Predicated region
    $region6: #{tpu_custom_call.1} parent=1 // pred_check
      _
    $region7: #{tpu_custom_call.1} parent=1 // pred_check_branch
      %11 = sbr.rel (0) target = $region9
    $region8: #{tpu_custom_call.1} parent=1 // pred_region
      _
    $region9: #{tpu_custom_call.1} parent=1 // pred_fallthru
      _
    %v12 = vld [vmem:[%s0] sm:$0xff]
    %v13 = vld [vmem:[%s0 + $0x8] sm:$0xff]
    %v14 = vld [vmem:[%s1] sm:$0xff]
    %v15 = vld [vmem:[%s1 + $0x8] sm:$0xff]
    %v16 = vlaneseq
    %v17 = vand.u32 %v16, 127
    %vm18 = vcmask 64512
    %v19 = vsel %vm18, %v12, -inf
    %20 = vmax.xlane.f32.xlu0 %v19
    %v21 = vpop.xlane.xlu0 %20
    %v22 = vsel %vm18, %v13, -inf
    %23 = vmax.xlane.f32.xlu0 %v22
    %v24 = vpop.xlane.xlu0 %23
    %vm25 = vcmp.eq.f32.partialorder %v12, %v21
    %vm26 = vcmp.eq.f32.partialorder %v13, %v24
    %v27 = vsel %vm25, %v17, 8
    %v28 = vsel %vm26, %v17, 8
    %v29 = vsel %vm18, %v27, 2147483647
    %v30 = vand.u32 %v29, 65535
    %v31 = vshra.s32 %v29, 16
    %v32 = vcvt.s32.f32 %v30
    %v33 = vcvt.s32.f32 %v31
    %34 = vmin.xlane.f32.xlu0 %v33
    %v35 = vpop.xlane.xlu0 %34
    %vm36 = vcmp.eq.f32.partialorder %v33, %v35
    %v37 = vsel %vm36, %v32, inf
    %38 = vmin.xlane.f32.xlu0 %v37
    %v39 = vpop.xlane.xlu0 %38
    %v40 = vcvt.f32.s32 %v39
    %v41 = vcvt.f32.s32 %v35
    %v42 = vshll.u32 %v41, 16
    %v43 = vadd.s32 %v42, %v40
    %v44 = vsel %vm18, %v28, 2147483647
    %v45 = vand.u32 %v44, 65535
    %v46 = vshra.s32 %v44, 16
    %v47 = vcvt.s32.f32 %v45
    %v48 = vcvt.s32.f32 %v46
    %49 = vmin.xlane.f32.xlu0 %v48
    %v50 = vpop.xlane.xlu0 %49
    %vm51 = vcmp.eq.f32.partialorder %v48, %v50
    %v52 = vsel %vm51, %v47, inf
    %53 = vmin.xlane.f32.xlu0 %v52
    %v54 = vpop.xlane.xlu0 %53
    %v55 = vcvt.f32.s32 %v54
    %v56 = vcvt.f32.s32 %v50
    %v57 = vshll.u32 %v56, 16
    %v58 = vadd.s32 %v57, %v55
    %vm59 = vcmp.ne.s32.totalorder %v14, 4294967295
    %vm60 = vcmp.ne.s32.totalorder %v15, 4294967295
    %vm61 = vcmp.ne.s32.totalorder %v43, 4294967295
    %vm62 = vcmp.ne.s32.totalorder %v58, 4294967295
    %vm63 = vmand %vm59, %vm61
    %vm64 = vmand %vm60, %vm62
    %vm65 = vcmp.eq.s32.totalorder %v43, %v14
    %vm66 = vcmp.eq.s32.totalorder %v58, %v15
    %vm67 = vmand %vm65, %vm63
    %vm68 = vmand %vm66, %vm64
    %v69 = vsel %vm67, 1, 0
    %v70 = vsel %vm68, 1, 0
    %vm71 = vcmask 7168
    %v72 = vsel %vm71, %v69, 0
    %v73 = vsel %vm71, %v70, 0
    %v74 = vadd.s32 %v72, %v73
    %v75 = vand.u32 %v74, 65535
    %v76 = vshrl.u32 %v74, 16
    %v77 = vcvt.s32.f32 %v75
    %v78 = vcvt.s32.f32 %v76
    %79 = vadd.xlane.f32.xlu0 %v77
    %v80 = vpop.xlane.xlu0 %79
    %81 = vadd.xlane.f32.xlu0 %v78
    %v82 = vpop.xlane.xlu0 %81
    %v83 = vcvt.f32.s32 %v80
    %v84 = vcvt.f32.s32 %v82
    %v85 = vshll.u32 %v84, 16
    %v86 = vadd.s32 %v85, %v83
    %v87 = vrot.slane %v86, 4
    %v88 = vadd.s32 %v86, %v87
    %v89 = vrot.slane %v88, 2
    %v90 = vadd.s32 %v88, %v89
    %v91 = vrot.slane %v90, 1
    %v92 = vadd.s32 %v90, %v91
    %s93 = vtos %v92
    %s94 = scalar_lea.smem [#allocation2], 0
    %95 = sst [smem:[%s94]] %s93
    %v96 = vsel %vm63, 1, 0
    %v97 = vsel %vm64, 1, 0
    %v98 = vsel %vm71, %v96, 0
    %v99 = vsel %vm71, %v97, 0
    %v100 = vadd.s32 %v98, %v99
    %v101 = vand.u32 %v100, 65535
    %v102 = vshrl.u32 %v100, 16
    %v103 = vcvt.s32.f32 %v101
    %v104 = vcvt.s32.f32 %v102
    %105 = vadd.xlane.f32.xlu0 %v103
    %v106 = vpop.xlane.xlu0 %105
    %107 = vadd.xlane.f32.xlu0 %v104
    %v108 = vpop.xlane.xlu0 %107
    %v109 = vcvt.f32.s32 %v106
    %v110 = vcvt.f32.s32 %v108
    %v111 = vshll.u32 %v110, 16
    %v112 = vadd.s32 %v111, %v109
    %v113 = vrot.slane %v112, 4
    %v114 = vadd.s32 %v112, %v113
    %v115 = vrot.slane %v114, 2
    %v116 = vadd.s32 %v114, %v115
    %v117 = vrot.slane %v116, 1
    %v118 = vadd.s32 %v116, %v117
    %s119 = vtos %v118
    %s120 = scalar_lea.smem [#allocation2], 1
    %121 = sst [smem:[%s120]] %s119
    // Predicated region
    $region10: #{tpu_custom_call.1} parent=1 // pred_check
      _
    $region11: #{tpu_custom_call.1} parent=1 // pred_check_branch
      %123 = sbr.rel (0) target = $region13
    $region12: #{tpu_custom_call.1} parent=1 // pred_region
      %s125 = ssub.s32 16, 16
      %126 = vsyncadd [#allocation3], %s125
      %129 = dma.smem_to_hbm [#allocation2], 16, %s2, [#allocation3]
    $region13: #{tpu_custom_call.1} parent=1 // pred_fallthru
      _
    // Predicated region
    $region14: #{tpu_custom_call.1} parent=1 // pred_check
      _
    $region15: #{tpu_custom_call.1} parent=1 // pred_check_branch
      %131 = sbr.rel (0) target = $region17
    $region16: #{tpu_custom_call.1} parent=1 // pred_region
      %132 = dma.done [#allocation3], 16
    $region17: #{tpu_custom_call.1} parent=1 // pred_fallthru
      _
    %133 = sfence
    %134 = vsyncpa [#allocation3], 1

</llo_original>
